<compile_context>
chip_gen: v7x
topology: tpu7x:2x2x1
jax: 0.10.0
libtpu: 0.0.40
codegen_flags: <defaults>
</compile_context>

<pallas_src>
import jax
import jax.numpy as jnp
from jax.experimental import pallas as pl
from jax.experimental.pallas import tpu as pltpu

EPS = 1e-3


def _fused_kernel(x_ref, s_ref, w_ref, g_ref, b_ref, o_ref):
    # x_ref: (Cin, M)    x125 viewed as (672, H*W), native NCHW layout (N=1)
    # s_ref: (1, Cin)    pre-hardsigmoid per-channel gate input
    # w_ref: (Cout, Cin) 1x1 conv weight
    # g_ref: (Cout, 1)   batchnorm gamma
    # b_ref: (Cout, 1)   batchnorm beta
    # o_ref: (Cout, M)

    # Hardsigmoid: relu6(x + 3) / 6 == clip(x/6 + 0.5, 0, 1); fold into weights
    # (per-Cin gate commutes with the contraction over Cin).
    gate = jnp.clip(s_ref[...] * (1.0 / 6.0) + 0.5, 0.0, 1.0)        # (1, Cin)
    w = (w_ref[...] * gate).astype(jnp.bfloat16)                     # (Cout, Cin)

    # 1x1 conv == single MXU matmul in the native orientation.
    y = jnp.dot(w, x_ref[...].astype(jnp.bfloat16),
                preferred_element_type=jnp.float32)                  # (Cout, M)

    # Train-mode BatchNorm2d: batch statistics over the N*H*W pixels (axis 1
    # here), biased variance, computed in a single pass over y.
    m = y.shape[1]
    s = jnp.sum(y, axis=1, keepdims=True)                            # (Cout, 1)
    ss = jnp.sum(y * y, axis=1, keepdims=True)                       # (Cout, 1)
    mean = s * (1.0 / m)
    var = ss * (1.0 / m) - mean * mean
    scale = jax.lax.rsqrt(var + EPS) * g_ref[...]                    # (Cout, 1)
    o_ref[...] = (y - mean) * scale + b_ref[...]


def fused_forward(x125, x129, conv_w, gamma, beta):
    """x125: (1, Cin, H, W) NCHW; x129: (1, Cin, 1, 1); conv_w: (Cout, Cin, 1, 1)."""
    n, cin, h, w = x125.shape
    cout = conv_w.shape[0]
    assert n == 1, "kernel specialized to N=1 (module spec shape (1, 672, 14, 14))"
    # TODO(synk): train-mode BatchNorm running_mean/running_var (momentum=0.01)
    # state updates are module side effects and are not produced here.

    m = h * w
    x_flat = x125.reshape(cin, m)          # free view of NCHW (no transpose)
    s_flat = x129.reshape(1, cin)          # free
    w_mat = conv_w.reshape(cout, cin)      # free (1x1 kernel), no .T needed
    g = gamma.reshape(cout, 1)
    b = beta.reshape(cout, 1)

    vmem = pl.BlockSpec(memory_space=pltpu.MemorySpace.VMEM)
    out_flat = pl.pallas_call(
        _fused_kernel,
        out_shape=jax.ShapeDtypeStruct((cout, m), jnp.float32),
        in_specs=[vmem, vmem, vmem, vmem, vmem],
        out_specs=vmem,
        cost_estimate=pl.CostEstimate(
            flops=2 * cout * cin * m,
            transcendentals=0,
            bytes_accessed=4 * (cin * m + cout * cin + cout * m + cin + 2 * cout),
        ),
    )(x_flat, s_flat, w_mat, g, b)

    return out_flat.reshape(n, cout, h, w)   # free view back to NCHW


def reference_forward(x125, x129, conv_w, gamma, beta):
    """Pure-JAX reference of the PyTorch forward (train-mode batchnorm)."""
    gate = jnp.clip(x129 / 6.0 + 0.5, 0.0, 1.0)                  # (N, Cin, 1, 1)
    x = gate * x125                                              # (N, Cin, H, W)
    y = jax.lax.conv_general_dilated(
        x, conv_w, window_strides=(1, 1), padding="VALID",
        dimension_numbers=("NCHW", "OIHW", "NCHW"))
    mean = jnp.mean(y, axis=(0, 2, 3), keepdims=True)
    var = jnp.mean((y - mean) ** 2, axis=(0, 2, 3), keepdims=True)
    y_hat = (y - mean) * jax.lax.rsqrt(var + EPS)
    return y_hat * gamma.reshape(1, -1, 1, 1) + beta.reshape(1, -1, 1, 1)


if __name__ == "__main__":
    key = jax.random.PRNGKey(0)
    k1, k2, k3, k4, k5 = jax.random.split(key, 5)

    N, CIN, COUT, H, W = 1, 672, 112, 14, 14

    x125 = jax.random.normal(k1, (N, CIN, H, W), dtype=jnp.float32)
    x129 = jax.random.normal(k2, (N, CIN, 1, 1), dtype=jnp.float32)

    # Deterministic synthetic parameters (shapes per the module's __init__).
    conv_w = 0.05 * jax.random.normal(k3, (COUT, CIN, 1, 1), dtype=jnp.float32)
    gamma = 1.0 + 0.1 * jax.random.normal(k4, (COUT,), dtype=jnp.float32)
    beta = 0.1 * jax.random.normal(k5, (COUT,), dtype=jnp.float32)

    out = fused_forward(x125, x129, conv_w, gamma, beta)
    out = jax.block_until_ready(out)

    ref = reference_forward(x125, x129, conv_w, gamma, beta)
    assert out.shape == (N, COUT, H, W)
    assert jnp.allclose(out, ref, atol=2e-2, rtol=2e-2), "mismatch vs reference"

    print("KERNEL_OK")
</pallas_src>

<mosaic_0001>
module attributes {stable_mosaic.version = 11 : i64} {
  func.func @_fused_kernel(%arg0: memref<672x196xf32, #tpu.memory_space<vmem>>, %arg1: memref<1x672xf32, #tpu.memory_space<vmem>>, %arg2: memref<112x672xf32, #tpu.memory_space<vmem>>, %arg3: memref<112x1xf32, #tpu.memory_space<vmem>>, %arg4: memref<112x1xf32, #tpu.memory_space<vmem>>, %arg5: memref<112x196xf32, #tpu.memory_space<vmem>>) attributes {dimension_semantics = [], scalar_prefetch = 0 : i64, scratch_operands = 0 : i64, tpu.core_type = #tpu.core_type<tc>} {
    %c0 = arith.constant 0 : index
    %c0_0 = arith.constant 0 : index
    %0 = vector.load %arg1[%c0, %c0_0] : memref<1x672xf32, #tpu.memory_space<vmem>>, vector<1x672xf32>
    %cst = arith.constant 0.166666672 : f32
    %1 = vector.broadcast %cst : f32 to vector<1x672xf32>
    %2 = arith.mulf %0, %1 : vector<1x672xf32>
    %cst_1 = arith.constant 5.000000e-01 : f32
    %3 = vector.broadcast %cst_1 : f32 to vector<1x672xf32>
    %4 = arith.addf %2, %3 : vector<1x672xf32>
    %cst_2 = arith.constant 0.000000e+00 : f32
    %cst_3 = arith.constant 1.000000e+00 : f32
    %5 = vector.broadcast %cst_2 : f32 to vector<1x672xf32>
    %6 = arith.maximumf %5, %4 : vector<1x672xf32>
    %7 = vector.broadcast %cst_3 : f32 to vector<1x672xf32>
    %8 = arith.minimumf %7, %6 : vector<1x672xf32>
    %c0_4 = arith.constant 0 : index
    %c0_5 = arith.constant 0 : index
    %9 = vector.load %arg2[%c0_4, %c0_5] : memref<112x672xf32, #tpu.memory_space<vmem>>, vector<112x672xf32>
    %10 = vector.broadcast %8 : vector<1x672xf32> to vector<112x672xf32>
    %11 = arith.mulf %9, %10 : vector<112x672xf32>
    %12 = arith.truncf %11 : vector<112x672xf32> to vector<112x672xbf16>
    %c0_6 = arith.constant 0 : index
    %c0_7 = arith.constant 0 : index
    %13 = vector.load %arg0[%c0_6, %c0_7] : memref<672x196xf32, #tpu.memory_space<vmem>>, vector<672x196xf32>
    %14 = arith.truncf %13 : vector<672x196xf32> to vector<672x196xbf16>
    %cst_8 = arith.constant dense<0.000000e+00> : vector<112x196xf32>
    %15 = tpu.matmul %12, %14, %cst_8 {dimension_numbers = #tpu.dot_dimension_numbers<[1], [0], [0], [1], [0, 0, 1, 1], [], []>} : vector<112x672xbf16>, vector<672x196xbf16>, vector<112x196xf32> -> vector<112x196xf32>
    %cst_9 = arith.constant dense<0.000000e+00> : vector<112xf32>
    %16 = vector.multi_reduction <add>, %15, %cst_9 [1] : vector<112x196xf32> to vector<112xf32>
    %17 = vector.shape_cast %16 : vector<112xf32> to vector<112x1xf32>
    %18 = arith.mulf %15, %15 : vector<112x196xf32>
    %cst_10 = arith.constant dense<0.000000e+00> : vector<112xf32>
    %19 = vector.multi_reduction <add>, %18, %cst_10 [1] : vector<112x196xf32> to vector<112xf32>
    %20 = vector.shape_cast %19 : vector<112xf32> to vector<112x1xf32>
    %cst_11 = arith.constant 0.00510204071 : f32
    %21 = vector.broadcast %cst_11 : f32 to vector<112x1xf32>
    %22 = arith.mulf %17, %21 : vector<112x1xf32>
    %cst_12 = arith.constant 0.00510204071 : f32
    %23 = vector.broadcast %cst_12 : f32 to vector<112x1xf32>
    %24 = arith.mulf %20, %23 : vector<112x1xf32>
    %25 = arith.mulf %22, %22 : vector<112x1xf32>
    %26 = arith.subf %24, %25 : vector<112x1xf32>
    %cst_13 = arith.constant 1.000000e-03 : f32
    %27 = vector.broadcast %cst_13 : f32 to vector<112x1xf32>
    %28 = arith.addf %26, %27 : vector<112x1xf32>
    %29 = math.rsqrt %28 : vector<112x1xf32>
    %c0_14 = arith.constant 0 : index
    %c0_15 = arith.constant 0 : index
    %30 = vector.load %arg3[%c0_14, %c0_15] : memref<112x1xf32, #tpu.memory_space<vmem>>, vector<112x1xf32>
    %31 = arith.mulf %29, %30 : vector<112x1xf32>
    %32 = vector.broadcast %22 : vector<112x1xf32> to vector<112x196xf32>
    %33 = arith.subf %15, %32 : vector<112x196xf32>
    %34 = vector.broadcast %31 : vector<112x1xf32> to vector<112x196xf32>
    %35 = arith.mulf %33, %34 : vector<112x196xf32>
    %c0_16 = arith.constant 0 : index
    %c0_17 = arith.constant 0 : index
    %36 = vector.load %arg4[%c0_16, %c0_17] : memref<112x1xf32, #tpu.memory_space<vmem>>, vector<112x1xf32>
    %37 = vector.broadcast %36 : vector<112x1xf32> to vector<112x196xf32>
    %38 = arith.addf %35, %37 : vector<112x196xf32>
    %c0_18 = arith.constant 0 : index
    %c0_19 = arith.constant 0 : index
    %39 = vector.load %arg5[%c0_18, %c0_19] : memref<112x196xf32, #tpu.memory_space<vmem>>, vector<112x196xf32>
    tpu.vector_store %arg5[%c0_18, %c0_19], %38 {strides = array<i32>} : memref<112x196xf32, #tpu.memory_space<vmem>>, vector<112x196xf32>,
    return
  }
}

</mosaic_0001>

<llo_original>
// kernel: tpu_custom_call.1
$region0: #{tpu_custom_call.1}
  #allocation0 [shape = 'u32[]', space=smem, size = 0x4, offset = 0x4, fixed_abs, tag = 'smem constant byte address 0x4 - core index']
  #allocation1 [shape = 'u32[144,128]{1,0:T(1,128)}', space=vmem, size = 0x12000, scoped, tag = 'internal scratch']
  %s0 = inlined_call_operand.vmem [shape: f32[672,196], index: 0, kind: input, shape index: {}]
  %s1 = inlined_call_operand.vmem [shape: f32[1,672], index: 1, kind: input, shape index: {}]
  %s2 = inlined_call_operand.vmem [shape: f32[112,672], index: 2, kind: input, shape index: {}]
  %s3 = inlined_call_operand.vmem [shape: f32[112,1], index: 3, kind: input, shape index: {}]
  %s4 = inlined_call_operand.vmem [shape: f32[112,1], index: 4, kind: input, shape index: {}]
  %s5 = inlined_call_operand.vmem [shape: f32[112,196], index: 5, kind: output, shape index: {}]
  %s6 = sld [smem:[#allocation0]]
  $region30: #{tpu_custom_call.1} parent=0
    _
  %s8 = ssub.s32 1, %s6
  %s9 = scalar_select 0, %s8, %s6
  // Predicated region
  $region2: #{tpu_custom_call.1} parent=0 // pred_check
    _
  $region3: #{tpu_custom_call.1} parent=0 // pred_check_branch
    %11 = sbr.rel (0) target = $region5
  $region4: #{tpu_custom_call.1} parent=0 // pred_region
    _
  $region5: #{tpu_custom_call.1} parent=0 // pred_fallthru
    _
  // Predicated region
  $region6: #{tpu_custom_call.1} parent=0 // pred_check
    _
  $region7: #{tpu_custom_call.1} parent=0 // pred_check_branch
    %13 = sbr.rel (0) target = $region9
  $region8: #{tpu_custom_call.1} parent=0 // pred_region
    _
  $region9: #{tpu_custom_call.1} parent=0 // pred_fallthru
    _
  // Predicated region
  $region10: #{tpu_custom_call.1} parent=0 // pred_check
    _
  $region11: #{tpu_custom_call.1} parent=0 // pred_check_branch
    %15 = sbr.rel (0) target = $region13
  $region12: #{tpu_custom_call.1} parent=0 // pred_region
    _
  $region13: #{tpu_custom_call.1} parent=0 // pred_fallthru
    _
  // Predicated region
  $region14: #{tpu_custom_call.1} parent=0 // pred_check
    _
  $region15: #{tpu_custom_call.1} parent=0 // pred_check_branch
    %17 = sbr.rel (0) target = $region17
  $region16: #{tpu_custom_call.1} parent=0 // pred_region
    _
  $region17: #{tpu_custom_call.1} parent=0 // pred_fallthru
    _
  // Predicated region
  $region18: #{tpu_custom_call.1} parent=0 // pred_check
    _
  $region19: #{tpu_custom_call.1} parent=0 // pred_check_branch
    %19 = sbr.rel (0) target = $region21
  $region20: #{tpu_custom_call.1} parent=0 // pred_region
    _
  $region21: #{tpu_custom_call.1} parent=0 // pred_fallthru
    _
  %v21 = vld [vmem:[%s1] sm:$0x3f]
  %v22 = vmul.f32 %v21, 0.16666667
  %v23 = vadd.f32 %v22, 0.5
  %v24 = vmax.f32 %v23, 0.0
  %v25 = vmin.f32 %v24, 1.0
  %v26 = vld [vmem:[%s2] sm:$0xff]
  %v27 = vld [vmem:[%s2 + $0x8] sm:$0xff]
  %v28 = vld [vmem:[%s2 + $0x10] sm:$0xff]
  %v29 = vld [vmem:[%s2 + $0x18] sm:$0xff]
  %v30 = vld [vmem:[%s2 + $0x20] sm:$0xff]
  %v31 = vld [vmem:[%s2 + $0x28] sm:$0xff]
  %v32 = vld [vmem:[%s2 + $0x30] sm:$0xff]
  %v33 = vld [vmem:[%s2 + $0x38] sm:$0xff]
  %v34 = vld [vmem:[%s2 + $0x40] sm:$0xff]
  %v35 = vld [vmem:[%s2 + $0x48] sm:$0xff]
  %v36 = vld [vmem:[%s2 + $0x50] sm:$0xff]
  %v37 = vld [vmem:[%s2 + $0x58] sm:$0xff]
  %v38 = vld [vmem:[%s2 + $0x60] sm:$0xff]
  %v39 = vld [vmem:[%s2 + $0x68] sm:$0xff]
  %v40 = vld [vmem:[%s2 + $0x70] sm:$0xff]
  %v41 = vld [vmem:[%s2 + $0x78] sm:$0xff]
  %v42 = vld [vmem:[%s2 + $0x80] sm:$0xff]
  %v43 = vld [vmem:[%s2 + $0x88] sm:$0xff]
  %v44 = vld [vmem:[%s2 + $0x90] sm:$0xff]
  %v45 = vld [vmem:[%s2 + $0x98] sm:$0xff]
  %v46 = vld [vmem:[%s2 + $0xa0] sm:$0xff]
  %v47 = vld [vmem:[%s2 + $0xa8] sm:$0xff]
  %v48 = vld [vmem:[%s2 + $0xb0] sm:$0xff]
  %v49 = vld [vmem:[%s2 + $0xb8] sm:$0xff]
  %v50 = vld [vmem:[%s2 + $0xc0] sm:$0xff]
  %v51 = vld [vmem:[%s2 + $0xc8] sm:$0xff]
  %v52 = vld [vmem:[%s2 + $0xd0] sm:$0xff]
  %v53 = vld [vmem:[%s2 + $0xd8] sm:$0xff]
  %v54 = vld [vmem:[%s2 + $0xe0] sm:$0xff]
  %v55 = vld [vmem:[%s2 + $0xe8] sm:$0xff]
  %v56 = vld [vmem:[%s2 + $0xf0] sm:$0xff]
  %v57 = vld [vmem:[%s2 + $0xf8] sm:$0xff]
  %v58 = vld [vmem:[%s2 + $0x100] sm:$0xff]
  %v59 = vld [vmem:[%s2 + $0x108] sm:$0xff]
  %v60 = vld [vmem:[%s2 + $0x110] sm:$0xff]
  %v61 = vld [vmem:[%s2 + $0x118] sm:$0xff]
  %v62 = vld [vmem:[%s2 + $0x120] sm:$0xff]
  %v63 = vld [vmem:[%s2 + $0x128] sm:$0xff]
  %v64 = vld [vmem:[%s2 + $0x130] sm:$0xff]
  %v65 = vld [vmem:[%s2 + $0x138] sm:$0xff]
  %v66 = vld [vmem:[%s2 + $0x140] sm:$0xff]
  %v67 = vld [vmem:[%s2 + $0x148] sm:$0xff]
  %v68 = vld [vmem:[%s2 + $0x150] sm:$0xff]
  %v69 = vld [vmem:[%s2 + $0x158] sm:$0xff]
  %v70 = vld [vmem:[%s2 + $0x160] sm:$0xff]
  %v71 = vld [vmem:[%s2 + $0x168] sm:$0xff]
  %v72 = vld [vmem:[%s2 + $0x170] sm:$0xff]
  %v73 = vld [vmem:[%s2 + $0x178] sm:$0xff]
  %v74 = vld [vmem:[%s2 + $0x180] sm:$0xff]
  %v75 = vld [vmem:[%s2 + $0x188] sm:$0xff]
  %v76 = vld [vmem:[%s2 + $0x190] sm:$0xff]
  %v77 = vld [vmem:[%s2 + $0x198] sm:$0xff]
  %v78 = vld [vmem:[%s2 + $0x1a0] sm:$0xff]
  %v79 = vld [vmem:[%s2 + $0x1a8] sm:$0xff]
  %v80 = vld [vmem:[%s2 + $0x1b0] sm:$0xff]
  %v81 = vld [vmem:[%s2 + $0x1b8] sm:$0xff]
  %v82 = vld [vmem:[%s2 + $0x1c0] sm:$0xff]
  %v83 = vld [vmem:[%s2 + $0x1c8] sm:$0xff]
  %v84 = vld [vmem:[%s2 + $0x1d0] sm:$0xff]
  %v85 = vld [vmem:[%s2 + $0x1d8] sm:$0xff]
  %v86 = vld [vmem:[%s2 + $0x1e0] sm:$0xff]
  %v87 = vld [vmem:[%s2 + $0x1e8] sm:$0xff]
  %v88 = vld [vmem:[%s2 + $0x1f0] sm:$0xff]
  %v89 = vld [vmem:[%s2 + $0x1f8] sm:$0xff]
  %v90 = vld [vmem:[%s2 + $0x200] sm:$0xff]
  %v91 = vld [vmem:[%s2 + $0x208] sm:$0xff]
  %v92 = vld [vmem:[%s2 + $0x210] sm:$0xff]
  %v93 = vld [vmem:[%s2 + $0x218] sm:$0xff]
  %v94 = vld [vmem:[%s2 + $0x220] sm:$0xff]
  %v95 = vld [vmem:[%s2 + $0x228] sm:$0xff]
  %v96 = vld [vmem:[%s2 + $0x230] sm:$0xff]
  %v97 = vld [vmem:[%s2 + $0x238] sm:$0xff]
  %v98 = vld [vmem:[%s2 + $0x240] sm:$0xff]
  %v99 = vld [vmem:[%s2 + $0x248] sm:$0xff]
  %v100 = vld [vmem:[%s2 + $0x250] sm:$0xff]
  %v101 = vld [vmem:[%s2 + $0x258] sm:$0xff]
  %v102 = vld [vmem:[%s2 + $0x260] sm:$0xff]
  %v103 = vld [vmem:[%s2 + $0x268] sm:$0xff]
  %v104 = vld [vmem:[%s2 + $0x270] sm:$0xff]
  %v105 = vld [vmem:[%s2 + $0x278] sm:$0xff]
  %v106 = vld [vmem:[%s2 + $0x280] sm:$0xff]
  %v107 = vld [vmem:[%s2 + $0x288] sm:$0xff]
  %v108 = vld [vmem:[%s2 + $0x290] sm:$0xff]
  %v109 = vld [vmem:[%s2 + $0x298] sm:$0xff]
  %v111 = vlaneseq
  %v112 = vshrl.u32 %v111, 7
  %v113 = vsub.s32 0, %v112
  %v114 = vrot.slane %v25, %v113
  %v115 = vlaneseq
  %v116 = vshrl.u32 %v115, 7
  %v117 = vsub.s32 1, %v116
  %v118 = vrot.slane %v25, %v117
  %v119 = vlaneseq
  %v120 = vshrl.u32 %v119, 7
  %v121 = vsub.s32 2, %v120
  %v122 = vrot.slane %v25, %v121
  %v123 = vlaneseq
  %v124 = vshrl.u32 %v123, 7
  %v125 = vsub.s32 3, %v124
  %v126 = vrot.slane %v25, %v125
  %v127 = vlaneseq
  %v128 = vshrl.u32 %v127, 7
  %v129 = vsub.s32 4, %v128
  %v130 = vrot.slane %v25, %v129
  %v131 = vlaneseq
  %v132 = vshrl.u32 %v131, 7
  %v133 = vsub.s32 5, %v132
  %v134 = vrot.slane %v25, %v133
  %v141 = vmul.f32 %v26, %v114
  %v142 = vmul.f32 %v27, %v118
  %v143 = vmul.f32 %v28, %v122
  %v144 = vmul.f32 %v29, %v126
  %v145 = vmul.f32 %v30, %v130
  %v146 = vmul.f32 %v31, %v134
  %v147 = vmul.f32 %v32, %v114
  %v148 = vmul.f32 %v33, %v118
  %v149 = vmul.f32 %v34, %v122
  %v150 = vmul.f32 %v35, %v126
  %v151 = vmul.f32 %v36, %v130
  %v152 = vmul.f32 %v37, %v134
  %v153 = vmul.f32 %v38, %v114
  %v154 = vmul.f32 %v39, %v118
  %v155 = vmul.f32 %v40, %v122
  %v156 = vmul.f32 %v41, %v126
  %v157 = vmul.f32 %v42, %v130
  %v158 = vmul.f32 %v43, %v134
  %v159 = vmul.f32 %v44, %v114
  %v160 = vmul.f32 %v45, %v118
  %v161 = vmul.f32 %v46, %v122
  %v162 = vmul.f32 %v47, %v126
  %v163 = vmul.f32 %v48, %v130
  %v164 = vmul.f32 %v49, %v134
  %v165 = vmul.f32 %v50, %v114
  %v166 = vmul.f32 %v51, %v118
  %v167 = vmul.f32 %v52, %v122
  %v168 = vmul.f32 %v53, %v126
  %v169 = vmul.f32 %v54, %v130
  %v170 = vmul.f32 %v55, %v134
  %v171 = vmul.f32 %v56, %v114
  %v172 = vmul.f32 %v57, %v118
  %v173 = vmul.f32 %v58, %v122
  %v174 = vmul.f32 %v59, %v126
  %v175 = vmul.f32 %v60, %v130
  %v176 = vmul.f32 %v61, %v134
  %v177 = vmul.f32 %v62, %v114
  %v178 = vmul.f32 %v63, %v118
  %v179 = vmul.f32 %v64, %v122
  %v180 = vmul.f32 %v65, %v126
  %v181 = vmul.f32 %v66, %v130
  %v182 = vmul.f32 %v67, %v134
  %v183 = vmul.f32 %v68, %v114
  %v184 = vmul.f32 %v69, %v118
  %v185 = vmul.f32 %v70, %v122
  %v186 = vmul.f32 %v71, %v126
  %v187 = vmul.f32 %v72, %v130
  %v188 = vmul.f32 %v73, %v134
  %v189 = vmul.f32 %v74, %v114
  %v190 = vmul.f32 %v75, %v118
  %v191 = vmul.f32 %v76, %v122
  %v192 = vmul.f32 %v77, %v126
  %v193 = vmul.f32 %v78, %v130
  %v194 = vmul.f32 %v79, %v134
  %v195 = vmul.f32 %v80, %v114
  %v196 = vmul.f32 %v81, %v118
  %v197 = vmul.f32 %v82, %v122
  %v198 = vmul.f32 %v83, %v126
  %v199 = vmul.f32 %v84, %v130
  %v200 = vmul.f32 %v85, %v134
  %v201 = vmul.f32 %v86, %v114
  %v202 = vmul.f32 %v87, %v118
  %v203 = vmul.f32 %v88, %v122
  %v204 = vmul.f32 %v89, %v126
  %v205 = vmul.f32 %v90, %v130
  %v206 = vmul.f32 %v91, %v134
  %v207 = vmul.f32 %v92, %v114
  %v208 = vmul.f32 %v93, %v118
  %v209 = vmul.f32 %v94, %v122
  %v210 = vmul.f32 %v95, %v126
  %v211 = vmul.f32 %v96, %v130
  %v212 = vmul.f32 %v97, %v134
  %v213 = vmul.f32 %v98, %v114
  %v214 = vmul.f32 %v99, %v118
  %v215 = vmul.f32 %v100, %v122
  %v216 = vmul.f32 %v101, %v126
  %v217 = vmul.f32 %v102, %v130
  %v218 = vmul.f32 %v103, %v134
  %v219 = vmul.f32 %v104, %v114
  %v220 = vmul.f32 %v105, %v118
  %v221 = vmul.f32 %v106, %v122
  %v222 = vmul.f32 %v107, %v126
  %v223 = vmul.f32 %v108, %v130
  %v224 = vmul.f32 %v109, %v134
  %v225 = vpack.c.bf16 %v147, %v141
  %v226 = vpack.c.bf16 %v148, %v142
  %v227 = vpack.c.bf16 %v149, %v143
  %v228 = vpack.c.bf16 %v150, %v144
  %v229 = vpack.c.bf16 %v151, %v145
  %v230 = vpack.c.bf16 %v152, %v146
  %v231 = vpack.c.bf16 %v159, %v153
  %v232 = vpack.c.bf16 %v160, %v154
  %v233 = vpack.c.bf16 %v161, %v155
  %v234 = vpack.c.bf16 %v162, %v156
  %v235 = vpack.c.bf16 %v163, %v157
  %v236 = vpack.c.bf16 %v164, %v158
  %v237 = vpack.c.bf16 %v171, %v165
  %v238 = vpack.c.bf16 %v172, %v166
  %v239 = vpack.c.bf16 %v173, %v167
  %v240 = vpack.c.bf16 %v174, %v168
  %v241 = vpack.c.bf16 %v175, %v169
  %v242 = vpack.c.bf16 %v176, %v170
  %v243 = vpack.c.bf16 %v183, %v177
  %v244 = vpack.c.bf16 %v184, %v178
  %v245 = vpack.c.bf16 %v185, %v179
  %v246 = vpack.c.bf16 %v186, %v180
  %v247 = vpack.c.bf16 %v187, %v181
  %v248 = vpack.c.bf16 %v188, %v182
  %v249 = vpack.c.bf16 %v195, %v189
  %v250 = vpack.c.bf16 %v196, %v190
  %v251 = vpack.c.bf16 %v197, %v191
  %v252 = vpack.c.bf16 %v198, %v192
  %v253 = vpack.c.bf16 %v199, %v193
  %v254 = vpack.c.bf16 %v200, %v194
  %v255 = vpack.c.bf16 %v207, %v201
  %v256 = vpack.c.bf16 %v208, %v202
  %v257 = vpack.c.bf16 %v209, %v203
  %v258 = vpack.c.bf16 %v210, %v204
  %v259 = vpack.c.bf16 %v211, %v205
  %v260 = vpack.c.bf16 %v212, %v206
  %v261 = vpack.c.bf16 %v219, %v213
  %v262 = vpack.c.bf16 %v220, %v214
  %v263 = vpack.c.bf16 %v221, %v215
  %v264 = vpack.c.bf16 %v222, %v216
  %v265 = vpack.c.bf16 %v223, %v217
  %v266 = vpack.c.bf16 %v224, %v218
  %v267 = vld [vmem:[%s0] sm:$0xff]
  %v268 = vld [vmem:[%s0 + $0x8] sm:$0xff]
  %v269 = vld [vmem:[%s0 + $0x10] sm:$0xff]
  %v270 = vld [vmem:[%s0 + $0x18] sm:$0xff]
  %v271 = vld [vmem:[%s0 + $0x20] sm:$0xff]
  %v272 = vld [vmem:[%s0 + $0x28] sm:$0xff]
  %v273 = vld [vmem:[%s0 + $0x30] sm:$0xff]
  %v274 = vld [vmem:[%s0 + $0x38] sm:$0xff]
  %v275 = vld [vmem:[%s0 + $0x40] sm:$0xff]
  %v276 = vld [vmem:[%s0 + $0x48] sm:$0xff]
  %v277 = vld [vmem:[%s0 + $0x50] sm:$0xff]
  %v278 = vld [vmem:[%s0 + $0x58] sm:$0xff]
  %v279 = vld [vmem:[%s0 + $0x60] sm:$0xff]
  %v280 = vld [vmem:[%s0 + $0x68] sm:$0xff]
  %v281 = vld [vmem:[%s0 + $0x70] sm:$0xff]
  %v282 = vld [vmem:[%s0 + $0x78] sm:$0xff]
  %v283 = vld [vmem:[%s0 + $0x80] sm:$0xff]
  %v284 = vld [vmem:[%s0 + $0x88] sm:$0xff]
  %v285 = vld [vmem:[%s0 + $0x90] sm:$0xff]
  %v286 = vld [vmem:[%s0 + $0x98] sm:$0xff]
  %v287 = vld [vmem:[%s0 + $0xa0] sm:$0xff]
  %v288 = vld [vmem:[%s0 + $0xa8] sm:$0xff]
  %v289 = vld [vmem:[%s0 + $0xb0] sm:$0xff]
  %v290 = vld [vmem:[%s0 + $0xb8] sm:$0xff]
  %v291 = vld [vmem:[%s0 + $0xc0] sm:$0xff]
  %v292 = vld [vmem:[%s0 + $0xc8] sm:$0xff]
  %v293 = vld [vmem:[%s0 + $0xd0] sm:$0xff]
  %v294 = vld [vmem:[%s0 + $0xd8] sm:$0xff]
  %v295 = vld [vmem:[%s0 + $0xe0] sm:$0xff]
  %v296 = vld [vmem:[%s0 + $0xe8] sm:$0xff]
  %v297 = vld [vmem:[%s0 + $0xf0] sm:$0xff]
  %v298 = vld [vmem:[%s0 + $0xf8] sm:$0xff]
  %v299 = vld [vmem:[%s0 + $0x100] sm:$0xff]
  %v300 = vld [vmem:[%s0 + $0x108] sm:$0xff]
  %v301 = vld [vmem:[%s0 + $0x110] sm:$0xff]
  %v302 = vld [vmem:[%s0 + $0x118] sm:$0xff]
  %v303 = vld [vmem:[%s0 + $0x120] sm:$0xff]
  %v304 = vld [vmem:[%s0 + $0x128] sm:$0xff]
  %v305 = vld [vmem:[%s0 + $0x130] sm:$0xff]
  %v306 = vld [vmem:[%s0 + $0x138] sm:$0xff]
  %v307 = vld [vmem:[%s0 + $0x140] sm:$0xff]
  %v308 = vld [vmem:[%s0 + $0x148] sm:$0xff]
  %v309 = vld [vmem:[%s0 + $0x150] sm:$0xff]
  %v310 = vld [vmem:[%s0 + $0x158] sm:$0xff]
  %v311 = vld [vmem:[%s0 + $0x160] sm:$0xff]
  %v312 = vld [vmem:[%s0 + $0x168] sm:$0xff]
  %v313 = vld [vmem:[%s0 + $0x170] sm:$0xff]
  %v314 = vld [vmem:[%s0 + $0x178] sm:$0xff]
  %v315 = vld [vmem:[%s0 + $0x180] sm:$0xff]
  %v316 = vld [vmem:[%s0 + $0x188] sm:$0xff]
  %v317 = vld [vmem:[%s0 + $0x190] sm:$0xff]
  %v318 = vld [vmem:[%s0 + $0x198] sm:$0xff]
  %v319 = vld [vmem:[%s0 + $0x1a0] sm:$0xff]
  %v320 = vld [vmem:[%s0 + $0x1a8] sm:$0xff]
  %v321 = vld [vmem:[%s0 + $0x1b0] sm:$0xff]
  %v322 = vld [vmem:[%s0 + $0x1b8] sm:$0xff]
  %v323 = vld [vmem:[%s0 + $0x1c0] sm:$0xff]
  %v324 = vld [vmem:[%s0 + $0x1c8] sm:$0xff]
  %v325 = vld [vmem:[%s0 + $0x1d0] sm:$0xff]
  %v326 = vld [vmem:[%s0 + $0x1d8] sm:$0xff]
  %v327 = vld [vmem:[%s0 + $0x1e0] sm:$0xff]
  %v328 = vld [vmem:[%s0 + $0x1e8] sm:$0xff]
  %v329 = vld [vmem:[%s0 + $0x1f0] sm:$0xff]
  %v330 = vld [vmem:[%s0 + $0x1f8] sm:$0xff]
  %v331 = vld [vmem:[%s0 + $0x200] sm:$0xff]
  %v332 = vld [vmem:[%s0 + $0x208] sm:$0xff]
  %v333 = vld [vmem:[%s0 + $0x210] sm:$0xff]
  %v334 = vld [vmem:[%s0 + $0x218] sm:$0xff]
  %v335 = vld [vmem:[%s0 + $0x220] sm:$0xff]
  %v336 = vld [vmem:[%s0 + $0x228] sm:$0xff]
  %v337 = vld [vmem:[%s0 + $0x230] sm:$0xff]
  %v338 = vld [vmem:[%s0 + $0x238] sm:$0xff]
  %v339 = vld [vmem:[%s0 + $0x240] sm:$0xff]
  %v340 = vld [vmem:[%s0 + $0x248] sm:$0xff]
  %v341 = vld [vmem:[%s0 + $0x250] sm:$0xff]
  %v342 = vld [vmem:[%s0 + $0x258] sm:$0xff]
  %v343 = vld [vmem:[%s0 + $0x260] sm:$0xff]
  %v344 = vld [vmem:[%s0 + $0x268] sm:$0xff]
  %v345 = vld [vmem:[%s0 + $0x270] sm:$0xff]
  %v346 = vld [vmem:[%s0 + $0x278] sm:$0xff]
  %v347 = vld [vmem:[%s0 + $0x280] sm:$0xff]
  %v348 = vld [vmem:[%s0 + $0x288] sm:$0xff]
  %v349 = vld [vmem:[%s0 + $0x290] sm:$0xff]
  %v350 = vld [vmem:[%s0 + $0x298] sm:$0xff]
  %v351 = vld [vmem:[%s0 + $0x2a0] sm:$0xff]
  %v352 = vld [vmem:[%s0 + $0x2a8] sm:$0xff]
  %v353 = vld [vmem:[%s0 + $0x2b0] sm:$0xff]
  %v354 = vld [vmem:[%s0 + $0x2b8] sm:$0xff]
  %v355 = vld [vmem:[%s0 + $0x2c0] sm:$0xff]
  %v356 = vld [vmem:[%s0 + $0x2c8] sm:$0xff]
  %v357 = vld [vmem:[%s0 + $0x2d0] sm:$0xff]
  %v358 = vld [vmem:[%s0 + $0x2d8] sm:$0xff]
  %v359 = vld [vmem:[%s0 + $0x2e0] sm:$0xff]
  %v360 = vld [vmem:[%s0 + $0x2e8] sm:$0xff]
  %v361 = vld [vmem:[%s0 + $0x2f0] sm:$0xff]
  %v362 = vld [vmem:[%s0 + $0x2f8] sm:$0xff]
  %v363 = vld [vmem:[%s0 + $0x300] sm:$0xff]
  %v364 = vld [vmem:[%s0 + $0x308] sm:$0xff]
  %v365 = vld [vmem:[%s0 + $0x310] sm:$0xff]
  %v366 = vld [vmem:[%s0 + $0x318] sm:$0xff]
  %v367 = vld [vmem:[%s0 + $0x320] sm:$0xff]
  %v368 = vld [vmem:[%s0 + $0x328] sm:$0xff]
  %v369 = vld [vmem:[%s0 + $0x330] sm:$0xff]
  %v370 = vld [vmem:[%s0 + $0x338] sm:$0xff]
  %v371 = vld [vmem:[%s0 + $0x340] sm:$0xff]
  %v372 = vld [vmem:[%s0 + $0x348] sm:$0xff]
  %v373 = vld [vmem:[%s0 + $0x350] sm:$0xff]
  %v374 = vld [vmem:[%s0 + $0x358] sm:$0xff]
  %v375 = vld [vmem:[%s0 + $0x360] sm:$0xff]
  %v376 = vld [vmem:[%s0 + $0x368] sm:$0xff]
  %v377 = vld [vmem:[%s0 + $0x370] sm:$0xff]
  %v378 = vld [vmem:[%s0 + $0x378] sm:$0xff]
  %v379 = vld [vmem:[%s0 + $0x380] sm:$0xff]
  %v380 = vld [vmem:[%s0 + $0x388] sm:$0xff]
  %v381 = vld [vmem:[%s0 + $0x390] sm:$0xff]
  %v382 = vld [vmem:[%s0 + $0x398] sm:$0xff]
  %v383 = vld [vmem:[%s0 + $0x3a0] sm:$0xff]
  %v384 = vld [vmem:[%s0 + $0x3a8] sm:$0xff]
  %v385 = vld [vmem:[%s0 + $0x3b0] sm:$0xff]
  %v386 = vld [vmem:[%s0 + $0x3b8] sm:$0xff]
  %v387 = vld [vmem:[%s0 + $0x3c0] sm:$0xff]
  %v388 = vld [vmem:[%s0 + $0x3c8] sm:$0xff]
  %v389 = vld [vmem:[%s0 + $0x3d0] sm:$0xff]
  %v390 = vld [vmem:[%s0 + $0x3d8] sm:$0xff]
  %v391 = vld [vmem:[%s0 + $0x3e0] sm:$0xff]
  %v392 = vld [vmem:[%s0 + $0x3e8] sm:$0xff]
  %v393 = vld [vmem:[%s0 + $0x3f0] sm:$0xff]
  %v394 = vld [vmem:[%s0 + $0x3f8] sm:$0xff]
  %v395 = vld [vmem:[%s0 + $0x400] sm:$0xff]
  %v396 = vld [vmem:[%s0 + $0x408] sm:$0xff]
  %v397 = vld [vmem:[%s0 + $0x410] sm:$0xff]
  %v398 = vld [vmem:[%s0 + $0x418] sm:$0xff]
  %v399 = vld [vmem:[%s0 + $0x420] sm:$0xff]
  %v400 = vld [vmem:[%s0 + $0x428] sm:$0xff]
  %v401 = vld [vmem:[%s0 + $0x430] sm:$0xff]
  %v402 = vld [vmem:[%s0 + $0x438] sm:$0xff]
  %v403 = vld [vmem:[%s0 + $0x440] sm:$0xff]
  %v404 = vld [vmem:[%s0 + $0x448] sm:$0xff]
  %v405 = vld [vmem:[%s0 + $0x450] sm:$0xff]
  %v406 = vld [vmem:[%s0 + $0x458] sm:$0xff]
  %v407 = vld [vmem:[%s0 + $0x460] sm:$0xff]
  %v408 = vld [vmem:[%s0 + $0x468] sm:$0xff]
  %v409 = vld [vmem:[%s0 + $0x470] sm:$0xff]
  %v410 = vld [vmem:[%s0 + $0x478] sm:$0xff]
  %v411 = vld [vmem:[%s0 + $0x480] sm:$0xff]
  %v412 = vld [vmem:[%s0 + $0x488] sm:$0xff]
  %v413 = vld [vmem:[%s0 + $0x490] sm:$0xff]
  %v414 = vld [vmem:[%s0 + $0x498] sm:$0xff]
  %v415 = vld [vmem:[%s0 + $0x4a0] sm:$0xff]
  %v416 = vld [vmem:[%s0 + $0x4a8] sm:$0xff]
  %v417 = vld [vmem:[%s0 + $0x4b0] sm:$0xff]
  %v418 = vld [vmem:[%s0 + $0x4b8] sm:$0xff]
  %v419 = vld [vmem:[%s0 + $0x4c0] sm:$0xff]
  %v420 = vld [vmem:[%s0 + $0x4c8] sm:$0xff]
  %v421 = vld [vmem:[%s0 + $0x4d0] sm:$0xff]
  %v422 = vld [vmem:[%s0 + $0x4d8] sm:$0xff]
  %v423 = vld [vmem:[%s0 + $0x4e0] sm:$0xff]
  %v424 = vld [vmem:[%s0 + $0x4e8] sm:$0xff]
  %v425 = vld [vmem:[%s0 + $0x4f0] sm:$0xff]
  %v426 = vld [vmem:[%s0 + $0x4f8] sm:$0xff]
  %v427 = vld [vmem:[%s0 + $0x500] sm:$0xff]
  %v428 = vld [vmem:[%s0 + $0x508] sm:$0xff]
  %v429 = vld [vmem:[%s0 + $0x510] sm:$0xff]
  %v430 = vld [vmem:[%s0 + $0x518] sm:$0xff]
  %v431 = vld [vmem:[%s0 + $0x520] sm:$0xff]
  %v432 = vld [vmem:[%s0 + $0x528] sm:$0xff]
  %v433 = vld [vmem:[%s0 + $0x530] sm:$0xff]
  %v434 = vld [vmem:[%s0 + $0x538] sm:$0xff]
  %v435 = vpack.c.bf16 %v269, %v267
  %v436 = vpack.c.bf16 %v270, %v268
  %v437 = vpack.c.bf16 %v273, %v271
  %v438 = vpack.c.bf16 %v274, %v272
  %v439 = vpack.c.bf16 %v277, %v275
  %v440 = vpack.c.bf16 %v278, %v276
  %v441 = vpack.c.bf16 %v281, %v279
  %v442 = vpack.c.bf16 %v282, %v280
  %v443 = vpack.c.bf16 %v285, %v283
  %v444 = vpack.c.bf16 %v286, %v284
  %v445 = vpack.c.bf16 %v289, %v287
  %v446 = vpack.c.bf16 %v290, %v288
  %v447 = vpack.c.bf16 %v293, %v291
  %v448 = vpack.c.bf16 %v294, %v292
  %v449 = vpack.c.bf16 %v297, %v295
  %v450 = vpack.c.bf16 %v298, %v296
  %v451 = vpack.c.bf16 %v301, %v299
  %v452 = vpack.c.bf16 %v302, %v300
  %v453 = vpack.c.bf16 %v305, %v303
  %v454 = vpack.c.bf16 %v306, %v304
  %v455 = vpack.c.bf16 %v309, %v307
  %v456 = vpack.c.bf16 %v310, %v308
  %v457 = vpack.c.bf16 %v313, %v311
  %v458 = vpack.c.bf16 %v314, %v312
  %v459 = vpack.c.bf16 %v317, %v315
  %v460 = vpack.c.bf16 %v318, %v316
  %v461 = vpack.c.bf16 %v321, %v319
  %v462 = vpack.c.bf16 %v322, %v320
  %v463 = vpack.c.bf16 %v325, %v323
  %v464 = vpack.c.bf16 %v326, %v324
  %v465 = vpack.c.bf16 %v329, %v327
  %v466 = vpack.c.bf16 %v330, %v328
  %v467 = vpack.c.bf16 %v333, %v331
  %v468 = vpack.c.bf16 %v334, %v332
  %v469 = vpack.c.bf16 %v337, %v335
  %v470 = vpack.c.bf16 %v338, %v336
  %v471 = vpack.c.bf16 %v341, %v339
  %v472 = vpack.c.bf16 %v342, %v340
  %v473 = vpack.c.bf16 %v345, %v343
  %v474 = vpack.c.bf16 %v346, %v344
  %v475 = vpack.c.bf16 %v349, %v347
  %v476 = vpack.c.bf16 %v350, %v348
  %v477 = vpack.c.bf16 %v353, %v351
  %v478 = vpack.c.bf16 %v354, %v352
  %v479 = vpack.c.bf16 %v357, %v355
  %v480 = vpack.c.bf16 %v358, %v356
  %v481 = vpack.c.bf16 %v361, %v359
  %v482 = vpack.c.bf16 %v362, %v360
  %v483 = vpack.c.bf16 %v365, %v363
  %v484 = vpack.c.bf16 %v366, %v364
  %v485 = vpack.c.bf16 %v369, %v367
  %v486 = vpack.c.bf16 %v370, %v368
  %v487 = vpack.c.bf16 %v373, %v371
  %v488 = vpack.c.bf16 %v374, %v372
  %v489 = vpack.c.bf16 %v377, %v375
  %v490 = vpack.c.bf16 %v378, %v376
  %v491 = vpack.c.bf16 %v381, %v379
  %v492 = vpack.c.bf16 %v382, %v380
  %v493 = vpack.c.bf16 %v385, %v383
  %v494 = vpack.c.bf16 %v386, %v384
  %v495 = vpack.c.bf16 %v389, %v387
  %v496 = vpack.c.bf16 %v390, %v388
  %v497 = vpack.c.bf16 %v393, %v391
  %v498 = vpack.c.bf16 %v394, %v392
  %v499 = vpack.c.bf16 %v397, %v395
  %v500 = vpack.c.bf16 %v398, %v396
  %v501 = vpack.c.bf16 %v401, %v399
  %v502 = vpack.c.bf16 %v402, %v400
  %v503 = vpack.c.bf16 %v405, %v403
  %v504 = vpack.c.bf16 %v406, %v404
  %v505 = vpack.c.bf16 %v409, %v407
  %v506 = vpack.c.bf16 %v410, %v408
  %v507 = vpack.c.bf16 %v413, %v411
  %v508 = vpack.c.bf16 %v414, %v412
  %v509 = vpack.c.bf16 %v417, %v415
  %v510 = vpack.c.bf16 %v418, %v416
  %v511 = vpack.c.bf16 %v421, %v419
  %v512 = vpack.c.bf16 %v422, %v420
  %v513 = vpack.c.bf16 %v425, %v423
  %v514 = vpack.c.bf16 %v426, %v424
  %v515 = vpack.c.bf16 %v429, %v427
  %v516 = vpack.c.bf16 %v430, %v428
  %v517 = vpack.c.bf16 %v433, %v431
  %v518 = vpack.c.bf16 %v434, %v432
  %vm519 = vcmask 261120
  %v521 = vsel %vm519, %v230, 0
  %v524 = vsel %vm519, %v236, 0
  %v527 = vsel %vm519, %v242, 0
  %v530 = vsel %vm519, %v248, 0
  %v533 = vsel %vm519, %v254, 0
  %v536 = vsel %vm519, %v260, 0
  %v539 = vsel %vm519, %v266, 0
  %541 = vmatprep.subr.bf16.mxu0 %v436
  %542 = vmatpush1.bf16.msra.mxu0 %v435
  %543 = vmatprep.subr.bf16.mxu0 %v438
  %544 = vmatpush1.bf16.msra.mxu0 %v437
  %545 = vmatprep.subr.bf16.mxu0 %v440
  %546 = vmatpush1.bf16.msra.mxu0 %v439
  %547 = vmatprep.subr.bf16.mxu0 %v442
  %548 = vmatpush1.bf16.msra.mxu0 %v441
  %549 = vmatprep.subr.bf16.mxu0 %v444
  %550 = vmatpush1.bf16.msra.mxu0 %v443
  %551 = vmatprep.subr.bf16.mxu0 %v446
  %552 = vmatpush1.bf16.msra.mxu0 %v445
  %553 = vmatprep.subr.bf16.mxu0 %v448
  %554 = vmatpush1.bf16.msra.mxu0 %v447
  %555 = vmatprep.subr.bf16.mxu0 %v450
  %556 = vmatpush1.bf16.msra.mxu0 %v449
  %557 = vmatprep.subr.bf16.mxu0 %v452
  %558 = vmatpush1.bf16.msra.mxu0 %v451
  %559 = vmatprep.subr.bf16.mxu0 %v454
  %560 = vmatpush1.bf16.msra.mxu0 %v453
  %561 = vmatprep.subr.bf16.mxu0 %v456
  %562 = vmatpush1.bf16.msra.mxu0 %v455
  %563 = vmatprep.subr.bf16.mxu0 %v458
  %564 = vmatpush1.bf16.msra.mxu0 %v457
  %565 = vmatprep.subr.bf16.mxu0 %v460
  %566 = vmatpush1.bf16.msra.mxu0 %v459
  %567 = vmatprep.subr.bf16.mxu0 %v462
  %568 = vmatpush1.bf16.msra.mxu0 %v461
  %569 = vmatprep.subr.bf16.mxu0 %v464
  %570 = vmatpush1.bf16.msra.mxu0 %v463
  %571 = vmatprep.subr.bf16.mxu0 %v466
  %572 = vmatpush1.bf16.msra.mxu0 %v465
  %573 = vmatprep.mubr.bf16.mxu0 %v226
  %574 = vmatmul.mubr.bf16.gmra.mrb[0].mxu0 %v225
  %v575 = vpop.f32.mrb[0].mxu0
  %v576 = vadd.f32 0.0, %v575
  %v577 = vpop.f32.mrb[0].mxu0
  %v578 = vadd.f32 0.0, %v577
  %v579 = vpop.f32.mrb[0].mxu0
  %v580 = vadd.f32 0.0, %v579
  %v581 = vpop.f32.mrb[0].mxu0
  %v582 = vadd.f32 0.0, %v581
  %583 = vmatprep.mubr.bf16.mxu0 %v232
  %584 = vmatmul.mubr.bf16.gmra.mrb[0].mxu0 %v231
  %v585 = vpop.f32.mrb[0].mxu0
  %v586 = vadd.f32 0.0, %v585
  %v587 = vpop.f32.mrb[0].mxu0
  %v588 = vadd.f32 0.0, %v587
  %v589 = vpop.f32.mrb[0].mxu0
  %v590 = vadd.f32 0.0, %v589
  %v591 = vpop.f32.mrb[0].mxu0
  %v592 = vadd.f32 0.0, %v591
  %593 = vmatprep.mubr.bf16.mxu0 %v238
  %594 = vmatmul.mubr.bf16.gmra.mrb[0].mxu0 %v237
  %v595 = vpop.f32.mrb[0].mxu0
  %v596 = vadd.f32 0.0, %v595
  %v597 = vpop.f32.mrb[0].mxu0
  %v598 = vadd.f32 0.0, %v597
  %v599 = vpop.f32.mrb[0].mxu0
  %v600 = vadd.f32 0.0, %v599
  %v601 = vpop.f32.mrb[0].mxu0
  %v602 = vadd.f32 0.0, %v601
  %603 = vmatprep.mubr.bf16.mxu0 %v244
  %604 = vmatmul.mubr.bf16.gmra.mrb[0].mxu0 %v243
  %v605 = vpop.f32.mrb[0].mxu0
  %v606 = vadd.f32 0.0, %v605
  %v607 = vpop.f32.mrb[0].mxu0
  %v608 = vadd.f32 0.0, %v607
  %v609 = vpop.f32.mrb[0].mxu0
  %v610 = vadd.f32 0.0, %v609
  %v611 = vpop.f32.mrb[0].mxu0
  %v612 = vadd.f32 0.0, %v611
  %613 = vmatprep.mubr.bf16.mxu0 %v250
  %614 = vmatmul.mubr.bf16.gmra.mrb[0].mxu0 %v249
  %v615 = vpop.f32.mrb[0].mxu0
  %v616 = vadd.f32 0.0, %v615
  %v617 = vpop.f32.mrb[0].mxu0
  %v618 = vadd.f32 0.0, %v617
  %v619 = vpop.f32.mrb[0].mxu0
  %v620 = vadd.f32 0.0, %v619
  %v621 = vpop.f32.mrb[0].mxu0
  %v622 = vadd.f32 0.0, %v621
  %623 = vmatprep.mubr.bf16.mxu0 %v256
  %624 = vmatmul.mubr.bf16.gmra.mrb[0].mxu0 %v255
  %v625 = vpop.f32.mrb[0].mxu0
  %v626 = vadd.f32 0.0, %v625
  %v627 = vpop.f32.mrb[0].mxu0
  %v628 = vadd.f32 0.0, %v627
  %v629 = vpop.f32.mrb[0].mxu0
  %v630 = vadd.f32 0.0, %v629
  %v631 = vpop.f32.mrb[0].mxu0
  %v632 = vadd.f32 0.0, %v631
  %633 = vmatprep.mubr.bf16.mxu0 %v262
  %634 = vmatmul.mubr.bf16.gmra.mrb[0].mxu0 %v261
  %v635 = vpop.f32.mrb[0].mxu0
  %v636 = vadd.f32 0.0, %v635
  %v637 = vpop.f32.mrb[0].mxu0
  %v638 = vadd.f32 0.0, %v637
  %v639 = vpop.f32.mrb[0].mxu0
  %v640 = vadd.f32 0.0, %v639
  %v641 = vpop.f32.mrb[0].mxu0
  %v642 = vadd.f32 0.0, %v641
  %643 = vdwg.mxu0
  %644 = vmatprep.subr.bf16.mxu0 %v468
  %645 = vmatpush1.bf16.msra.mxu0 %v467
  %646 = vmatprep.subr.bf16.mxu0 %v470
  %647 = vmatpush1.bf16.msra.mxu0 %v469
  %648 = vmatprep.subr.bf16.mxu0 %v472
  %649 = vmatpush1.bf16.msra.mxu0 %v471
  %650 = vmatprep.subr.bf16.mxu0 %v474
  %651 = vmatpush1.bf16.msra.mxu0 %v473
  %652 = vmatprep.subr.bf16.mxu0 %v476
  %653 = vmatpush1.bf16.msra.mxu0 %v475
  %654 = vmatprep.subr.bf16.mxu0 %v478
  %655 = vmatpush1.bf16.msra.mxu0 %v477
  %656 = vmatprep.subr.bf16.mxu0 %v480
  %657 = vmatpush1.bf16.msra.mxu0 %v479
  %658 = vmatprep.subr.bf16.mxu0 %v482
  %659 = vmatpush1.bf16.msra.mxu0 %v481
  %660 = vmatprep.subr.bf16.mxu0 %v484
  %661 = vmatpush1.bf16.msra.mxu0 %v483
  %662 = vmatprep.subr.bf16.mxu0 %v486
  %663 = vmatpush1.bf16.msra.mxu0 %v485
  %664 = vmatprep.subr.bf16.mxu0 %v488
  %665 = vmatpush1.bf16.msra.mxu0 %v487
  %666 = vmatprep.subr.bf16.mxu0 %v490
  %667 = vmatpush1.bf16.msra.mxu0 %v489
  %668 = vmatprep.subr.bf16.mxu0 %v492
  %669 = vmatpush1.bf16.msra.mxu0 %v491
  %670 = vmatprep.subr.bf16.mxu0 %v494
  %671 = vmatpush1.bf16.msra.mxu0 %v493
  %672 = vmatprep.subr.bf16.mxu0 %v496
  %673 = vmatpush1.bf16.msra.mxu0 %v495
  %674 = vmatprep.subr.bf16.mxu0 %v498
  %675 = vmatpush1.bf16.msra.mxu0 %v497
  %676 = vmatprep.mubr.bf16.mxu0 %v228
  %677 = vmatmul.mubr.bf16.gmra.mrb[0].mxu0 %v227
  %v678 = vpop.f32.mrb[0].mxu0
  %v679 = vadd.f32 %v576, %v678
  %v680 = vpop.f32.mrb[0].mxu0
  %v681 = vadd.f32 %v578, %v680
  %v682 = vpop.f32.mrb[0].mxu0
  %v683 = vadd.f32 %v580, %v682
  %v684 = vpop.f32.mrb[0].mxu0
  %v685 = vadd.f32 %v582, %v684
  %686 = vmatprep.mubr.bf16.mxu0 %v234
  %687 = vmatmul.mubr.bf16.gmra.mrb[0].mxu0 %v233
  %v688 = vpop.f32.mrb[0].mxu0
  %v689 = vadd.f32 %v586, %v688
  %v690 = vpop.f32.mrb[0].mxu0
  %v691 = vadd.f32 %v588, %v690
  %v692 = vpop.f32.mrb[0].mxu0
  %v693 = vadd.f32 %v590, %v692
  %v694 = vpop.f32.mrb[0].mxu0
  %v695 = vadd.f32 %v592, %v694
  %696 = vmatprep.mubr.bf16.mxu0 %v240
  %697 = vmatmul.mubr.bf16.gmra.mrb[0].mxu0 %v239
  %v698 = vpop.f32.mrb[0].mxu0
  %v699 = vadd.f32 %v596, %v698
  %v700 = vpop.f32.mrb[0].mxu0
  %v701 = vadd.f32 %v598, %v700
  %v702 = vpop.f32.mrb[0].mxu0
  %v703 = vadd.f32 %v600, %v702
  %v704 = vpop.f32.mrb[0].mxu0
  %v705 = vadd.f32 %v602, %v704
  %706 = vmatprep.mubr.bf16.mxu0 %v246
  %707 = vmatmul.mubr.bf16.gmra.mrb[0].mxu0 %v245
  %v708 = vpop.f32.mrb[0].mxu0
  %v709 = vadd.f32 %v606, %v708
  %v710 = vpop.f32.mrb[0].mxu0
  %v711 = vadd.f32 %v608, %v710
  %v712 = vpop.f32.mrb[0].mxu0
  %v713 = vadd.f32 %v610, %v712
  %v714 = vpop.f32.mrb[0].mxu0
  %v715 = vadd.f32 %v612, %v714
  %716 = vmatprep.mubr.bf16.mxu0 %v252
  %717 = vmatmul.mubr.bf16.gmra.mrb[0].mxu0 %v251
  %v718 = vpop.f32.mrb[0].mxu0
  %v719 = vadd.f32 %v616, %v718
  %v720 = vpop.f32.mrb[0].mxu0
  %v721 = vadd.f32 %v618, %v720
  %v722 = vpop.f32.mrb[0].mxu0
  %v723 = vadd.f32 %v620, %v722
  %v724 = vpop.f32.mrb[0].mxu0
  %v725 = vadd.f32 %v622, %v724
  %726 = vmatprep.mubr.bf16.mxu0 %v258
  %727 = vmatmul.mubr.bf16.gmra.mrb[0].mxu0 %v257
  %v728 = vpop.f32.mrb[0].mxu0
  %v729 = vadd.f32 %v626, %v728
  %v730 = vpop.f32.mrb[0].mxu0
  %v731 = vadd.f32 %v628, %v730
  %v732 = vpop.f32.mrb[0].mxu0
  %v733 = vadd.f32 %v630, %v732
  %v734 = vpop.f32.mrb[0].mxu0
  %v735 = vadd.f32 %v632, %v734
  %736 = vmatprep.mubr.bf16.mxu0 %v264
  %737 = vmatmul.mubr.bf16.gmra.mrb[0].mxu0 %v263
  %v738 = vpop.f32.mrb[0].mxu0
  %v739 = vadd.f32 %v636, %v738
  %v740 = vpop.f32.mrb[0].mxu0
  %v741 = vadd.f32 %v638, %v740
  %v742 = vpop.f32.mrb[0].mxu0
  %v743 = vadd.f32 %v640, %v742
  %v744 = vpop.f32.mrb[0].mxu0
  %v745 = vadd.f32 %v642, %v744
  %746 = vdwg.mxu0
  %747 = vmatprep.subr.bf16.mxu0 %v500
  %748 = vmatpush1.bf16.msra.mxu0 %v499
  %749 = vmatprep.subr.bf16.mxu0 %v502
  %750 = vmatpush1.bf16.msra.mxu0 %v501
  %751 = vmatprep.subr.bf16.mxu0 %v504
  %752 = vmatpush1.bf16.msra.mxu0 %v503
  %753 = vmatprep.subr.bf16.mxu0 %v506
  %754 = vmatpush1.bf16.msra.mxu0 %v505
  %755 = vmatprep.subr.bf16.mxu0 %v508
  %756 = vmatpush1.bf16.msra.mxu0 %v507
  %757 = vmatprep.subr.bf16.mxu0 %v510
  %758 = vmatpush1.bf16.msra.mxu0 %v509
  %759 = vmatprep.subr.bf16.mxu0 %v512
  %760 = vmatpush1.bf16.msra.mxu0 %v511
  %761 = vmatprep.subr.bf16.mxu0 %v514
  %762 = vmatpush1.bf16.msra.mxu0 %v513
  %763 = vmatprep.subr.bf16.mxu0 %v516
  %764 = vmatpush1.bf16.msra.mxu0 %v515
  %765 = vmatprep.subr.bf16.mxu0 %v518
  %766 = vmatpush1.bf16.msra.mxu0 %v517
  %767 = vmatprep.subr.bf16.mxu0 0
  %768 = vmatpush1.bf16.msra.mxu0 0
  %769 = vmatprep.subr.bf16.mxu0 0
  %770 = vmatpush1.bf16.msra.mxu0 0
  %771 = vmatprep.subr.bf16.mxu0 0
  %772 = vmatpush1.bf16.msra.mxu0 0
  %773 = vmatprep.subr.bf16.mxu0 0
  %774 = vmatpush1.bf16.msra.mxu0 0
  %775 = vmatprep.subr.bf16.mxu0 0
  %776 = vmatpush1.bf16.msra.mxu0 0
  %777 = vmatprep.subr.bf16.mxu0 0
  %778 = vmatpush1.bf16.msra.mxu0 0
  %779 = vmatprep.mubr.bf16.mxu0 %v521
  %780 = vmatmul.mubr.bf16.gmra.mrb[0].mxu0 %v229
  %v781 = vpop.f32.mrb[0].mxu0
  %v782 = vadd.f32 %v679, %v781
  %v783 = vpop.f32.mrb[0].mxu0
  %v784 = vadd.f32 %v681, %v783
  %v785 = vpop.f32.mrb[0].mxu0
  %v786 = vadd.f32 %v683, %v785
  %v787 = vpop.f32.mrb[0].mxu0
  %v788 = vadd.f32 %v685, %v787
  %789 = vmatprep.mubr.bf16.mxu0 %v524
  %790 = vmatmul.mubr.bf16.gmra.mrb[0].mxu0 %v235
  %v791 = vpop.f32.mrb[0].mxu0
  %v792 = vadd.f32 %v689, %v791
  %v793 = vpop.f32.mrb[0].mxu0
  %v794 = vadd.f32 %v691, %v793
  %v795 = vpop.f32.mrb[0].mxu0
  %v796 = vadd.f32 %v693, %v795
  %v797 = vpop.f32.mrb[0].mxu0
  %v798 = vadd.f32 %v695, %v797
  %799 = vmatprep.mubr.bf16.mxu0 %v527
  %800 = vmatmul.mubr.bf16.gmra.mrb[0].mxu0 %v241
  %v801 = vpop.f32.mrb[0].mxu0
  %v802 = vadd.f32 %v699, %v801
  %v803 = vpop.f32.mrb[0].mxu0
  %v804 = vadd.f32 %v701, %v803
  %v805 = vpop.f32.mrb[0].mxu0
  %v806 = vadd.f32 %v703, %v805
  %v807 = vpop.f32.mrb[0].mxu0
  %v808 = vadd.f32 %v705, %v807
  %809 = vmatprep.mubr.bf16.mxu0 %v530
  %810 = vmatmul.mubr.bf16.gmra.mrb[0].mxu0 %v247
  %v811 = vpop.f32.mrb[0].mxu0
  %v812 = vadd.f32 %v709, %v811
  %v813 = vpop.f32.mrb[0].mxu0
  %v814 = vadd.f32 %v711, %v813
  %v815 = vpop.f32.mrb[0].mxu0
  %v816 = vadd.f32 %v713, %v815
  %v817 = vpop.f32.mrb[0].mxu0
  %v818 = vadd.f32 %v715, %v817
  %819 = vmatprep.mubr.bf16.mxu0 %v533
  %820 = vmatmul.mubr.bf16.gmra.mrb[0].mxu0 %v253
  %v821 = vpop.f32.mrb[0].mxu0
  %v822 = vadd.f32 %v719, %v821
  %v823 = vpop.f32.mrb[0].mxu0
  %v824 = vadd.f32 %v721, %v823
  %v825 = vpop.f32.mrb[0].mxu0
  %v826 = vadd.f32 %v723, %v825
  %v827 = vpop.f32.mrb[0].mxu0
  %v828 = vadd.f32 %v725, %v827
  %829 = vmatprep.mubr.bf16.mxu0 %v536
  %830 = vmatmul.mubr.bf16.gmra.mrb[0].mxu0 %v259
  %v831 = vpop.f32.mrb[0].mxu0
  %v832 = vadd.f32 %v729, %v831
  %v833 = vpop.f32.mrb[0].mxu0
  %v834 = vadd.f32 %v731, %v833
  %v835 = vpop.f32.mrb[0].mxu0
  %v836 = vadd.f32 %v733, %v835
  %v837 = vpop.f32.mrb[0].mxu0
  %v838 = vadd.f32 %v735, %v837
  %839 = vmatprep.mubr.bf16.mxu0 %v539
  %840 = vmatmul.mubr.bf16.gmra.mrb[0].mxu0 %v265
  %v841 = vpop.f32.mrb[0].mxu0
  %v842 = vadd.f32 %v739, %v841
  %v843 = vpop.f32.mrb[0].mxu0
  %v844 = vadd.f32 %v741, %v843
  %v845 = vpop.f32.mrb[0].mxu0
  %v846 = vadd.f32 %v743, %v845
  %v847 = vpop.f32.mrb[0].mxu0
  %v848 = vadd.f32 %v745, %v847
  %849 = vdwg.mxu0
  %vm850 = vcmask 556032
  %v851 = vsel %vm850, %v784, 0.0
  %v852 = vadd.f32 %v782, %v851
  %853 = vadd.xlane.f32.xlu0 %v852
  %v854 = vpop.xlane.xlu0 %853
  %v855 = vsel %vm850, %v788, 0.0
  %v856 = vadd.f32 %v786, %v855
  %857 = vadd.xlane.f32.xlu0 %v856
  %v858 = vpop.xlane.xlu0 %857
  %v859 = vsel %vm850, %v794, 0.0
  %v860 = vadd.f32 %v792, %v859
  %861 = vadd.xlane.f32.xlu0 %v860
  %v862 = vpop.xlane.xlu0 %861
  %v863 = vsel %vm850, %v798, 0.0
  %v864 = vadd.f32 %v796, %v863
  %865 = vadd.xlane.f32.xlu0 %v864
  %v866 = vpop.xlane.xlu0 %865
  %v867 = vsel %vm850, %v804, 0.0
  %v868 = vadd.f32 %v802, %v867
  %869 = vadd.xlane.f32.xlu0 %v868
  %v870 = vpop.xlane.xlu0 %869
  %v871 = vsel %vm850, %v808, 0.0
  %v872 = vadd.f32 %v806, %v871
  %873 = vadd.xlane.f32.xlu0 %v872
  %v874 = vpop.xlane.xlu0 %873
  %v875 = vsel %vm850, %v814, 0.0
  %v876 = vadd.f32 %v812, %v875
  %877 = vadd.xlane.f32.xlu0 %v876
  %v878 = vpop.xlane.xlu0 %877
  %v879 = vsel %vm850, %v818, 0.0
  %v880 = vadd.f32 %v816, %v879
  %881 = vadd.xlane.f32.xlu0 %v880
  %v882 = vpop.xlane.xlu0 %881
  %v883 = vsel %vm850, %v824, 0.0
  %v884 = vadd.f32 %v822, %v883
  %885 = vadd.xlane.f32.xlu0 %v884
  %v886 = vpop.xlane.xlu0 %885
  %v887 = vsel %vm850, %v828, 0.0
  %v888 = vadd.f32 %v826, %v887
  %889 = vadd.xlane.f32.xlu0 %v888
  %v890 = vpop.xlane.xlu0 %889
  %v891 = vsel %vm850, %v834, 0.0
  %v892 = vadd.f32 %v832, %v891
  %893 = vadd.xlane.f32.xlu0 %v892
  %v894 = vpop.xlane.xlu0 %893
  %v895 = vsel %vm850, %v838, 0.0
  %v896 = vadd.f32 %v836, %v895
  %897 = vadd.xlane.f32.xlu0 %v896
  %v898 = vpop.xlane.xlu0 %897
  %v899 = vsel %vm850, %v844, 0.0
  %v900 = vadd.f32 %v842, %v899
  %901 = vadd.xlane.f32.xlu0 %v900
  %v902 = vpop.xlane.xlu0 %901
  %v903 = vsel %vm850, %v848, 0.0
  %v904 = vadd.f32 %v846, %v903
  %905 = vadd.xlane.f32.xlu0 %v904
  %v906 = vpop.xlane.xlu0 %905
  %v907 = vmul.f32 %v782, %v782
  %v908 = vmul.f32 %v784, %v784
  %v909 = vmul.f32 %v786, %v786
  %v910 = vmul.f32 %v788, %v788
  %v911 = vmul.f32 %v792, %v792
  %v912 = vmul.f32 %v794, %v794
  %v913 = vmul.f32 %v796, %v796
  %v914 = vmul.f32 %v798, %v798
  %v915 = vmul.f32 %v802, %v802
  %v916 = vmul.f32 %v804, %v804
  %v917 = vmul.f32 %v806, %v806
  %v918 = vmul.f32 %v808, %v808
  %v919 = vmul.f32 %v812, %v812
  %v920 = vmul.f32 %v814, %v814
  %v921 = vmul.f32 %v816, %v816
  %v922 = vmul.f32 %v818, %v818
  %v923 = vmul.f32 %v822, %v822
  %v924 = vmul.f32 %v824, %v824
  %v925 = vmul.f32 %v826, %v826
  %v926 = vmul.f32 %v828, %v828
  %v927 = vmul.f32 %v832, %v832
  %v928 = vmul.f32 %v834, %v834
  %v929 = vmul.f32 %v836, %v836
  %v930 = vmul.f32 %v838, %v838
  %v931 = vmul.f32 %v842, %v842
  %v932 = vmul.f32 %v844, %v844
  %v933 = vmul.f32 %v846, %v846
  %v934 = vmul.f32 %v848, %v848
  %v935 = vsel %vm850, %v908, 0.0
  %v936 = vadd.f32 %v907, %v935
  %937 = vadd.xlane.f32.xlu0 %v936
  %v938 = vpop.xlane.xlu0 %937
  %v939 = vsel %vm850, %v910, 0.0
  %v940 = vadd.f32 %v909, %v939
  %941 = vadd.xlane.f32.xlu0 %v940
  %v942 = vpop.xlane.xlu0 %941
  %v943 = vsel %vm850, %v912, 0.0
  %v944 = vadd.f32 %v911, %v943
  %945 = vadd.xlane.f32.xlu0 %v944
  %v946 = vpop.xlane.xlu0 %945
  %v947 = vsel %vm850, %v914, 0.0
  %v948 = vadd.f32 %v913, %v947
  %949 = vadd.xlane.f32.xlu0 %v948
  %v950 = vpop.xlane.xlu0 %949
  %v951 = vsel %vm850, %v916, 0.0
  %v952 = vadd.f32 %v915, %v951
  %953 = vadd.xlane.f32.xlu0 %v952
  %v954 = vpop.xlane.xlu0 %953
  %v955 = vsel %vm850, %v918, 0.0
  %v956 = vadd.f32 %v917, %v955
  %957 = vadd.xlane.f32.xlu0 %v956
  %v958 = vpop.xlane.xlu0 %957
  %v959 = vsel %vm850, %v920, 0.0
  %v960 = vadd.f32 %v919, %v959
  %961 = vadd.xlane.f32.xlu0 %v960
  %v962 = vpop.xlane.xlu0 %961
  %v963 = vsel %vm850, %v922, 0.0
  %v964 = vadd.f32 %v921, %v963
  %965 = vadd.xlane.f32.xlu0 %v964
  %v966 = vpop.xlane.xlu0 %965
  %v967 = vsel %vm850, %v924, 0.0
  %v968 = vadd.f32 %v923, %v967
  %969 = vadd.xlane.f32.xlu0 %v968
  %v970 = vpop.xlane.xlu0 %969
  %v971 = vsel %vm850, %v926, 0.0
  %v972 = vadd.f32 %v925, %v971
  %973 = vadd.xlane.f32.xlu0 %v972
  %v974 = vpop.xlane.xlu0 %973
  %v975 = vsel %vm850, %v928, 0.0
  %v976 = vadd.f32 %v927, %v975
  %977 = vadd.xlane.f32.xlu0 %v976
  %v978 = vpop.xlane.xlu0 %977
  %v979 = vsel %vm850, %v930, 0.0
  %v980 = vadd.f32 %v929, %v979
  %981 = vadd.xlane.f32.xlu0 %v980
  %v982 = vpop.xlane.xlu0 %981
  %v983 = vsel %vm850, %v932, 0.0
  %v984 = vadd.f32 %v931, %v983
  %985 = vadd.xlane.f32.xlu0 %v984
  %v986 = vpop.xlane.xlu0 %985
  %v987 = vsel %vm850, %v934, 0.0
  %v988 = vadd.f32 %v933, %v987
  %989 = vadd.xlane.f32.xlu0 %v988
  %v990 = vpop.xlane.xlu0 %989
  %v991 = vmul.f32 %v854, 0.0051020407
  %v992 = vmul.f32 %v858, 0.0051020407
  %v993 = vmul.f32 %v862, 0.0051020407
  %v994 = vmul.f32 %v866, 0.0051020407
  %v995 = vmul.f32 %v870, 0.0051020407
  %v996 = vmul.f32 %v874, 0.0051020407
  %v997 = vmul.f32 %v878, 0.0051020407
  %v998 = vmul.f32 %v882, 0.0051020407
  %v999 = vmul.f32 %v886, 0.0051020407
  %v1000 = vmul.f32 %v890, 0.0051020407
  %v1001 = vmul.f32 %v894, 0.0051020407
  %v1002 = vmul.f32 %v898, 0.0051020407
  %v1003 = vmul.f32 %v902, 0.0051020407
  %v1004 = vmul.f32 %v906, 0.0051020407
  %v1005 = vmul.f32 %v938, 0.0051020407
  %v1006 = vmul.f32 %v942, 0.0051020407
  %v1007 = vmul.f32 %v946, 0.0051020407
  %v1008 = vmul.f32 %v950, 0.0051020407
  %v1009 = vmul.f32 %v954, 0.0051020407
  %v1010 = vmul.f32 %v958, 0.0051020407
  %v1011 = vmul.f32 %v962, 0.0051020407
  %v1012 = vmul.f32 %v966, 0.0051020407
  %v1013 = vmul.f32 %v970, 0.0051020407
  %v1014 = vmul.f32 %v974, 0.0051020407
  %v1015 = vmul.f32 %v978, 0.0051020407
  %v1016 = vmul.f32 %v982, 0.0051020407
  %v1017 = vmul.f32 %v986, 0.0051020407
  %v1018 = vmul.f32 %v990, 0.0051020407
  %v1019 = vmul.f32 %v991, %v991
  %v1020 = vmul.f32 %v992, %v992
  %v1021 = vmul.f32 %v993, %v993
  %v1022 = vmul.f32 %v994, %v994
  %v1023 = vmul.f32 %v995, %v995
  %v1024 = vmul.f32 %v996, %v996
  %v1025 = vmul.f32 %v997, %v997
  %v1026 = vmul.f32 %v998, %v998
  %v1027 = vmul.f32 %v999, %v999
  %v1028 = vmul.f32 %v1000, %v1000
  %v1029 = vmul.f32 %v1001, %v1001
  %v1030 = vmul.f32 %v1002, %v1002
  %v1031 = vmul.f32 %v1003, %v1003
  %v1032 = vmul.f32 %v1004, %v1004
  %v1033 = vsub.f32 %v1005, %v1019
  %v1034 = vsub.f32 %v1006, %v1020
  %v1035 = vsub.f32 %v1007, %v1021
  %v1036 = vsub.f32 %v1008, %v1022
  %v1037 = vsub.f32 %v1009, %v1023
  %v1038 = vsub.f32 %v1010, %v1024
  %v1039 = vsub.f32 %v1011, %v1025
  %v1040 = vsub.f32 %v1012, %v1026
  %v1041 = vsub.f32 %v1013, %v1027
  %v1042 = vsub.f32 %v1014, %v1028
  %v1043 = vsub.f32 %v1015, %v1029
  %v1044 = vsub.f32 %v1016, %v1030
  %v1045 = vsub.f32 %v1017, %v1031
  %v1046 = vsub.f32 %v1018, %v1032
  %v1047 = vadd.f32 %v1033, 0.001
  %v1048 = vadd.f32 %v1034, 0.001
  %v1049 = vadd.f32 %v1035, 0.001
  %v1050 = vadd.f32 %v1036, 0.001
  %v1051 = vadd.f32 %v1037, 0.001
  %v1052 = vadd.f32 %v1038, 0.001
  %v1053 = vadd.f32 %v1039, 0.001
  %v1054 = vadd.f32 %v1040, 0.001
  %v1055 = vadd.f32 %v1041, 0.001
  %v1056 = vadd.f32 %v1042, 0.001
  %v1057 = vadd.f32 %v1043, 0.001
  %v1058 = vadd.f32 %v1044, 0.001
  %v1059 = vadd.f32 %v1045, 0.001
  %v1060 = vadd.f32 %v1046, 0.001
  %v1061 = vrsqrt.pop %v1047
  %v1062 = vrsqrt.pop %v1048
  %v1063 = vrsqrt.pop %v1049
  %v1064 = vrsqrt.pop %v1050
  %v1065 = vrsqrt.pop %v1051
  %v1066 = vrsqrt.pop %v1052
  %v1067 = vrsqrt.pop %v1053
  %v1068 = vrsqrt.pop %v1054
  %v1069 = vrsqrt.pop %v1055
  %v1070 = vrsqrt.pop %v1056
  %v1071 = vrsqrt.pop %v1057
  %v1072 = vrsqrt.pop %v1058
  %v1073 = vrsqrt.pop %v1059
  %v1074 = vrsqrt.pop %v1060
  %v1075 = vld [vmem:[%s3] sm:$0xff]
  %v1076 = vld [vmem:[%s3 + $0x8] sm:$0xff]
  %v1077 = vld [vmem:[%s3 + $0x10] sm:$0xff]
  %v1078 = vld [vmem:[%s3 + $0x18] sm:$0xff]
  %v1079 = vld [vmem:[%s3 + $0x20] sm:$0xff]
  %v1080 = vld [vmem:[%s3 + $0x28] sm:$0xff]
  %v1081 = vld [vmem:[%s3 + $0x30] sm:$0xff]
  %v1082 = vld [vmem:[%s3 + $0x38] sm:$0xff]
  %v1083 = vld [vmem:[%s3 + $0x40] sm:$0xff]
  %v1084 = vld [vmem:[%s3 + $0x48] sm:$0xff]
  %v1085 = vld [vmem:[%s3 + $0x50] sm:$0xff]
  %v1086 = vld [vmem:[%s3 + $0x58] sm:$0xff]
  %v1087 = vld [vmem:[%s3 + $0x60] sm:$0xff]
  %v1088 = vld [vmem:[%s3 + $0x68] sm:$0xff]
  %v1089 = vmul.f32 %v1061, %v1075
  %v1090 = vmul.f32 %v1062, %v1076
  %v1091 = vmul.f32 %v1063, %v1077
  %v1092 = vmul.f32 %v1064, %v1078
  %v1093 = vmul.f32 %v1065, %v1079
  %v1094 = vmul.f32 %v1066, %v1080
  %v1095 = vmul.f32 %v1067, %v1081
  %v1096 = vmul.f32 %v1068, %v1082
  %v1097 = vmul.f32 %v1069, %v1083
  %v1098 = vmul.f32 %v1070, %v1084
  %v1099 = vmul.f32 %v1071, %v1085
  %v1100 = vmul.f32 %v1072, %v1086
  %v1101 = vmul.f32 %v1073, %v1087
  %v1102 = vmul.f32 %v1074, %v1088
  %v1103 = vsub.f32 %v782, %v991
  %v1104 = vsub.f32 %v784, %v991
  %v1105 = vsub.f32 %v786, %v992
  %v1106 = vsub.f32 %v788, %v992
  %v1107 = vsub.f32 %v792, %v993
  %v1108 = vsub.f32 %v794, %v993
  %v1109 = vsub.f32 %v796, %v994
  %v1110 = vsub.f32 %v798, %v994
  %v1111 = vsub.f32 %v802, %v995
  %v1112 = vsub.f32 %v804, %v995
  %v1113 = vsub.f32 %v806, %v996
  %v1114 = vsub.f32 %v808, %v996
  %v1115 = vsub.f32 %v812, %v997
  %v1116 = vsub.f32 %v814, %v997
  %v1117 = vsub.f32 %v816, %v998
  %v1118 = vsub.f32 %v818, %v998
  %v1119 = vsub.f32 %v822, %v999
  %v1120 = vsub.f32 %v824, %v999
  %v1121 = vsub.f32 %v826, %v1000
  %v1122 = vsub.f32 %v828, %v1000
  %v1123 = vsub.f32 %v832, %v1001
  %v1124 = vsub.f32 %v834, %v1001
  %v1125 = vsub.f32 %v836, %v1002
  %v1126 = vsub.f32 %v838, %v1002
  %v1127 = vsub.f32 %v842, %v1003
  %v1128 = vsub.f32 %v844, %v1003
  %v1129 = vsub.f32 %v846, %v1004
  %v1130 = vsub.f32 %v848, %v1004
  %1132 = vset.pattern.permute.xlu0 0
  %1133 = vperm.xlu0 %1132, %v1089
  %v1134 = vpop.permute.xlu0 %1133
  %1137 = vset.pattern.permute.xlu0 0
  %1138 = vperm.xlu0 %1137, %v1090
  %v1139 = vpop.permute.xlu0 %1138
  %1142 = vset.pattern.permute.xlu0 0
  %1143 = vperm.xlu0 %1142, %v1091
  %v1144 = vpop.permute.xlu0 %1143
  %1147 = vset.pattern.permute.xlu0 0
  %1148 = vperm.xlu0 %1147, %v1092
  %v1149 = vpop.permute.xlu0 %1148
  %1152 = vset.pattern.permute.xlu0 0
  %1153 = vperm.xlu0 %1152, %v1093
  %v1154 = vpop.permute.xlu0 %1153
  %1157 = vset.pattern.permute.xlu0 0
  %1158 = vperm.xlu0 %1157, %v1094
  %v1159 = vpop.permute.xlu0 %1158
  %1162 = vset.pattern.permute.xlu0 0
  %1163 = vperm.xlu0 %1162, %v1095
  %v1164 = vpop.permute.xlu0 %1163
  %1167 = vset.pattern.permute.xlu0 0
  %1168 = vperm.xlu0 %1167, %v1096
  %v1169 = vpop.permute.xlu0 %1168
  %1172 = vset.pattern.permute.xlu0 0
  %1173 = vperm.xlu0 %1172, %v1097
  %v1174 = vpop.permute.xlu0 %1173
  %1177 = vset.pattern.permute.xlu0 0
  %1178 = vperm.xlu0 %1177, %v1098
  %v1179 = vpop.permute.xlu0 %1178
  %1182 = vset.pattern.permute.xlu0 0
  %1183 = vperm.xlu0 %1182, %v1099
  %v1184 = vpop.permute.xlu0 %1183
  %1187 = vset.pattern.permute.xlu0 0
  %1188 = vperm.xlu0 %1187, %v1100
  %v1189 = vpop.permute.xlu0 %1188
  %1192 = vset.pattern.permute.xlu0 0
  %1193 = vperm.xlu0 %1192, %v1101
  %v1194 = vpop.permute.xlu0 %1193
  %1197 = vset.pattern.permute.xlu0 0
  %1198 = vperm.xlu0 %1197, %v1102
  %v1199 = vpop.permute.xlu0 %1198
  %v1201 = vmul.f32 %v1103, %v1134
  %v1202 = vmul.f32 %v1104, %v1134
  %v1203 = vmul.f32 %v1105, %v1139
  %v1204 = vmul.f32 %v1106, %v1139
  %v1205 = vmul.f32 %v1107, %v1144
  %v1206 = vmul.f32 %v1108, %v1144
  %v1207 = vmul.f32 %v1109, %v1149
  %v1208 = vmul.f32 %v1110, %v1149
  %v1209 = vmul.f32 %v1111, %v1154
  %v1210 = vmul.f32 %v1112, %v1154
  %v1211 = vmul.f32 %v1113, %v1159
  %v1212 = vmul.f32 %v1114, %v1159
  %v1213 = vmul.f32 %v1115, %v1164
  %v1214 = vmul.f32 %v1116, %v1164
  %v1215 = vmul.f32 %v1117, %v1169
  %v1216 = vmul.f32 %v1118, %v1169
  %v1217 = vmul.f32 %v1119, %v1174
  %v1218 = vmul.f32 %v1120, %v1174
  %v1219 = vmul.f32 %v1121, %v1179
  %v1220 = vmul.f32 %v1122, %v1179
  %v1221 = vmul.f32 %v1123, %v1184
  %v1222 = vmul.f32 %v1124, %v1184
  %v1223 = vmul.f32 %v1125, %v1189
  %v1224 = vmul.f32 %v1126, %v1189
  %v1225 = vmul.f32 %v1127, %v1194
  %v1226 = vmul.f32 %v1128, %v1194
  %v1227 = vmul.f32 %v1129, %v1199
  %v1228 = vmul.f32 %v1130, %v1199
  %v1229 = vld [vmem:[%s4] sm:$0xff]
  %v1230 = vld [vmem:[%s4 + $0x8] sm:$0xff]
  %v1231 = vld [vmem:[%s4 + $0x10] sm:$0xff]
  %v1232 = vld [vmem:[%s4 + $0x18] sm:$0xff]
  %v1233 = vld [vmem:[%s4 + $0x20] sm:$0xff]
  %v1234 = vld [vmem:[%s4 + $0x28] sm:$0xff]
  %v1235 = vld [vmem:[%s4 + $0x30] sm:$0xff]
  %v1236 = vld [vmem:[%s4 + $0x38] sm:$0xff]
  %v1237 = vld [vmem:[%s4 + $0x40] sm:$0xff]
  %v1238 = vld [vmem:[%s4 + $0x48] sm:$0xff]
  %v1239 = vld [vmem:[%s4 + $0x50] sm:$0xff]
  %v1240 = vld [vmem:[%s4 + $0x58] sm:$0xff]
  %v1241 = vld [vmem:[%s4 + $0x60] sm:$0xff]
  %v1242 = vld [vmem:[%s4 + $0x68] sm:$0xff]
  %1244 = vset.pattern.permute.xlu0 0
  %1245 = vperm.xlu0 %1244, %v1229
  %v1246 = vpop.permute.xlu0 %1245
  %1249 = vset.pattern.permute.xlu0 0
  %1250 = vperm.xlu0 %1249, %v1230
  %v1251 = vpop.permute.xlu0 %1250
  %1254 = vset.pattern.permute.xlu0 0
  %1255 = vperm.xlu0 %1254, %v1231
  %v1256 = vpop.permute.xlu0 %1255
  %1259 = vset.pattern.permute.xlu0 0
  %1260 = vperm.xlu0 %1259, %v1232
  %v1261 = vpop.permute.xlu0 %1260
  %1264 = vset.pattern.permute.xlu0 0
  %1265 = vperm.xlu0 %1264, %v1233
  %v1266 = vpop.permute.xlu0 %1265
  %1269 = vset.pattern.permute.xlu0 0
  %1270 = vperm.xlu0 %1269, %v1234
  %v1271 = vpop.permute.xlu0 %1270
  %1274 = vset.pattern.permute.xlu0 0
  %1275 = vperm.xlu0 %1274, %v1235
  %v1276 = vpop.permute.xlu0 %1275
  %1279 = vset.pattern.permute.xlu0 0
  %1280 = vperm.xlu0 %1279, %v1236
  %v1281 = vpop.permute.xlu0 %1280
  %1284 = vset.pattern.permute.xlu0 0
  %1285 = vperm.xlu0 %1284, %v1237
  %v1286 = vpop.permute.xlu0 %1285
  %1289 = vset.pattern.permute.xlu0 0
  %1290 = vperm.xlu0 %1289, %v1238
  %v1291 = vpop.permute.xlu0 %1290
  %1294 = vset.pattern.permute.xlu0 0
  %1295 = vperm.xlu0 %1294, %v1239
  %v1296 = vpop.permute.xlu0 %1295
  %1299 = vset.pattern.permute.xlu0 0
  %1300 = vperm.xlu0 %1299, %v1240
  %v1301 = vpop.permute.xlu0 %1300
  %1304 = vset.pattern.permute.xlu0 0
  %1305 = vperm.xlu0 %1304, %v1241
  %v1306 = vpop.permute.xlu0 %1305
  %1309 = vset.pattern.permute.xlu0 0
  %1310 = vperm.xlu0 %1309, %v1242
  %v1311 = vpop.permute.xlu0 %1310
  %v1313 = vadd.f32 %v1201, %v1246
  %v1314 = vadd.f32 %v1202, %v1246
  %v1315 = vadd.f32 %v1203, %v1251
  %v1316 = vadd.f32 %v1204, %v1251
  %v1317 = vadd.f32 %v1205, %v1256
  %v1318 = vadd.f32 %v1206, %v1256
  %v1319 = vadd.f32 %v1207, %v1261
  %v1320 = vadd.f32 %v1208, %v1261
  %v1321 = vadd.f32 %v1209, %v1266
  %v1322 = vadd.f32 %v1210, %v1266
  %v1323 = vadd.f32 %v1211, %v1271
  %v1324 = vadd.f32 %v1212, %v1271
  %v1325 = vadd.f32 %v1213, %v1276
  %v1326 = vadd.f32 %v1214, %v1276
  %v1327 = vadd.f32 %v1215, %v1281
  %v1328 = vadd.f32 %v1216, %v1281
  %v1329 = vadd.f32 %v1217, %v1286
  %v1330 = vadd.f32 %v1218, %v1286
  %v1331 = vadd.f32 %v1219, %v1291
  %v1332 = vadd.f32 %v1220, %v1291
  %v1333 = vadd.f32 %v1221, %v1296
  %v1334 = vadd.f32 %v1222, %v1296
  %v1335 = vadd.f32 %v1223, %v1301
  %v1336 = vadd.f32 %v1224, %v1301
  %v1337 = vadd.f32 %v1225, %v1306
  %v1338 = vadd.f32 %v1226, %v1306
  %v1339 = vadd.f32 %v1227, %v1311
  %v1340 = vadd.f32 %v1228, %v1311
  %1341 = vst [vmem:[%s5] sm:$0xff] %v1313
  %1342 = vst.msk [vmem:[%s5 + $0x8] sm:$0xff] %vm850, %v1314
  %1343 = vst [vmem:[%s5 + $0x10] sm:$0xff] %v1315
  %1344 = vst.msk [vmem:[%s5 + $0x18] sm:$0xff] %vm850, %v1316
  %1345 = vst [vmem:[%s5 + $0x20] sm:$0xff] %v1317
  %1346 = vst.msk [vmem:[%s5 + $0x28] sm:$0xff] %vm850, %v1318
  %1347 = vst [vmem:[%s5 + $0x30] sm:$0xff] %v1319
  %1348 = vst.msk [vmem:[%s5 + $0x38] sm:$0xff] %vm850, %v1320
  %1349 = vst [vmem:[%s5 + $0x40] sm:$0xff] %v1321
  %1350 = vst.msk [vmem:[%s5 + $0x48] sm:$0xff] %vm850, %v1322
  %1351 = vst [vmem:[%s5 + $0x50] sm:$0xff] %v1323
  %1352 = vst.msk [vmem:[%s5 + $0x58] sm:$0xff] %vm850, %v1324
  %1353 = vst [vmem:[%s5 + $0x60] sm:$0xff] %v1325
  %1354 = vst.msk [vmem:[%s5 + $0x68] sm:$0xff] %vm850, %v1326
  %1355 = vst [vmem:[%s5 + $0x70] sm:$0xff] %v1327
  %1356 = vst.msk [vmem:[%s5 + $0x78] sm:$0xff] %vm850, %v1328
  %1357 = vst [vmem:[%s5 + $0x80] sm:$0xff] %v1329
  %1358 = vst.msk [vmem:[%s5 + $0x88] sm:$0xff] %vm850, %v1330
  %1359 = vst [vmem:[%s5 + $0x90] sm:$0xff] %v1331
  %1360 = vst.msk [vmem:[%s5 + $0x98] sm:$0xff] %vm850, %v1332
  %1361 = vst [vmem:[%s5 + $0xa0] sm:$0xff] %v1333
  %1362 = vst.msk [vmem:[%s5 + $0xa8] sm:$0xff] %vm850, %v1334
  %1363 = vst [vmem:[%s5 + $0xb0] sm:$0xff] %v1335
  %1364 = vst.msk [vmem:[%s5 + $0xb8] sm:$0xff] %vm850, %v1336
  %1365 = vst [vmem:[%s5 + $0xc0] sm:$0xff] %v1337
  %1366 = vst.msk [vmem:[%s5 + $0xc8] sm:$0xff] %vm850, %v1338
  %1367 = vst [vmem:[%s5 + $0xd0] sm:$0xff] %v1339
  %1368 = vst.msk [vmem:[%s5 + $0xd8] sm:$0xff] %vm850, %v1340
  // Predicated region
  $region22: #{tpu_custom_call.1} parent=0 // pred_check
    _
  $region23: #{tpu_custom_call.1} parent=0 // pred_check_branch
    %1370 = sbr.rel (0) target = $region25
  $region24: #{tpu_custom_call.1} parent=0 // pred_region
    _
  $region25: #{tpu_custom_call.1} parent=0 // pred_fallthru
    _
  // Predicated region
  $region26: #{tpu_custom_call.1} parent=0 // pred_check
    _
  $region27: #{tpu_custom_call.1} parent=0 // pred_check_branch
    %1372 = sbr.rel (0) target = $region29
  $region28: #{tpu_custom_call.1} parent=0 // pred_region
    _
  $region29: #{tpu_custom_call.1} parent=0 // pred_fallthru
    _

</llo_original>
